<compile_context>
chip_gen: v6e
topology: v6e:2x2x1
jax: 0.10.0
libtpu: 0.0.40
codegen_flags: <defaults>
</compile_context>

<pallas_src>
import jax
import jax.numpy as jnp
from jax.experimental import pallas as pl
from jax.experimental.pallas import tpu as pltpu


def _round_up(x, m):
    return ((x + m - 1) // m) * m


def _pointwise_bn_silu_kernel(w_ref, b_ref, x_ref, o_ref):
    """Fused 1x1 transposed-conv + folded BN + SiLU on one spatial tile.

    w_ref: (C2, C1)      effective weight (BN scale folded in)
    b_ref: (C2, 1)       f32 folded bias (conv bias + BN shift)
    x_ref: (C1, TILE_P)  activations, spatial on lanes
    o_ref: (C2, TILE_P)  output tile, spatial on lanes -> lane-dense stores
    """
    acc = jnp.dot(w_ref[...], x_ref[...], preferred_element_type=jnp.float32)
    y = acc + b_ref[...]                                       # folded bias (f32)
    o_ref[...] = (y * jax.nn.sigmoid(y)).astype(o_ref.dtype)   # SiLU in f32


def dw_contrans2d_forward(x_nchw, params, eps=1e-5, tile_cap=8192,
                          vmem_budget_bytes=24 * 1024 * 1024):
    """Forward of DWContrans2d (defaults k=1, s=1, p=0). Input/output NCHW."""
    n, c1, h, w = x_nchw.shape
    wt = params["w"]                      # (C1, C2, 1, 1)  ConvTranspose2d layout
    bias = params["b"]                    # (C2,)
    gamma, beta, mean, var = params["bn"]
    c2 = wt.shape[1]

    # Fold BatchNorm (eval) + conv bias into an effective weight / bias (tiny).
    scale = gamma * jax.lax.rsqrt(var + eps)                              # (C2,)
    w_eff = (wt[:, :, 0, 0].T * scale[:, None]).astype(jnp.float32)      # (C2, C1)
    b_eff = ((bias - mean) * scale + beta).astype(jnp.float32)[:, None]  # (C2, 1)

    # Flatten spatial; choose the largest lane-dense tile that fits the VMEM
    # budget (double-buffered input + output tiles).
    hw = h * w
    itemsize = jnp.dtype(x_nchw.dtype).itemsize
    per_lane_bytes = 2 * c1 * itemsize + 2 * c2 * itemsize
    vmem_cap = max(128, (vmem_budget_bytes // max(per_lane_bytes, 1)) // 128 * 128)
    tile_p = min(tile_cap, vmem_cap, _round_up(hw, 128))
    hwp = _round_up(hw, tile_p)

    # reshape is a pure view; no dtype cast in the wrapper (avoids an extra
    # un-hidden HBM round trip over the activations).
    x_flat = x_nchw.reshape(n, c1, hw)
    if hwp != hw:
        x_flat = jnp.pad(x_flat, ((0, 0), (0, 0), (0, hwp - hw)))

    grid = (n, hwp // tile_p)

    out = pl.pallas_call(
        _pointwise_bn_silu_kernel,
        out_shape=jax.ShapeDtypeStruct((n, c2, hwp), x_nchw.dtype),
        grid_spec=pltpu.PrefetchScalarGridSpec(
            num_scalar_prefetch=0,
            grid=grid,
            in_specs=[
                pl.BlockSpec((c2, c1), lambda b, p: (0, 0)),   # weight, resident
                pl.BlockSpec((c2, 1), lambda b, p: (0, 0)),    # folded bias, resident
                pl.BlockSpec((None, c1, tile_p), lambda b, p: (b, 0, p)),
            ],
            out_specs=pl.BlockSpec((None, c2, tile_p), lambda b, p: (b, 0, p)),
        ),
        compiler_params=pltpu.CompilerParams(
            dimension_semantics=("parallel", "parallel"),
            vmem_limit_bytes=32 * 1024 * 1024,
        ),
    )(w_eff, b_eff, x_flat)

    if hwp != hw:
        out = out[:, :, :hw]
    return out.reshape(n, c2, h, w)


# ---------------- pure-JAX reference (faithful PyTorch eval semantics) ----------------
def _ref_forward(x_nchw, params, eps=1e-5):
    wt = params["w"][:, :, 0, 0]                      # (C1, C2)
    gamma, beta, mean, var = params["bn"]
    y = jnp.einsum("nchw,co->nohw", x_nchw, wt,
                   preferred_element_type=jnp.float32)
    y = y + params["b"][None, :, None, None]
    y = (y - mean[None, :, None, None]) * (gamma / jnp.sqrt(var + eps))[None, :, None, None]
    y = y + beta[None, :, None, None]
    return y * jax.nn.sigmoid(y)


if __name__ == "__main__":
    # Small shapes consistent with the module: batch=2, c1=4, c2=8, spatial 16x16.
    N, C1, C2, H, W = 2, 4, 8, 16, 16
    key = jax.random.PRNGKey(0)
    kx, kw, kb, kg, kbe, km, kv = jax.random.split(key, 7)

    x = jax.random.normal(kx, (N, C1, H, W), jnp.float32)

    params = {
        # ConvTranspose2d(c1, c2, 1, 1, 0, 0) weight: (in, out, kH, kW)
        "w": jax.random.normal(kw, (C1, C2, 1, 1), jnp.float32) * 0.1,
        "b": 0.1 * jax.random.normal(kb, (C2,), jnp.float32),
        # BatchNorm2d params: (gamma, beta, running_mean, running_var)
        "bn": (
            1.0 + 0.1 * jax.random.normal(kg, (C2,), jnp.float32),
            0.1 * jax.random.normal(kbe, (C2,), jnp.float32),
            0.1 * jax.random.normal(km, (C2,), jnp.float32),
            1.0 + jax.nn.softplus(jax.random.normal(kv, (C2,), jnp.float32)),
        ),
    }

    out = jax.block_until_ready(jax.jit(dw_contrans2d_forward)(x, params))
    assert out.shape == (N, C2, H, W), out.shape

    ref = jax.block_until_ready(_ref_forward(x, params))
    max_err = float(jnp.max(jnp.abs(out - ref)))
    # Kernel runs the channel mix on the MXU with f32 accumulation; tolerance
    # covers MXU default-precision decomposition of the f32 matmul.
    assert jnp.allclose(out, ref, rtol=2e-2, atol=1e-2), max_err

    print("KERNEL_OK")
</pallas_src>

<mosaic_0001>
module attributes {stable_mosaic.version = 11 : i64} {
  func.func @_pointwise_bn_silu_kernel(%arg0: i32, %arg1: i32, %arg2: memref<8x4xf32, #tpu.memory_space<vmem>>, %arg3: memref<8x1xf32, #tpu.memory_space<vmem>>, %arg4: memref<1x4x256xf32, #tpu.memory_space<vmem>>, %arg5: memref<1x8x256xf32, #tpu.memory_space<vmem>>) attributes {dimension_semantics = [#tpu.dimension_semantics<parallel>, #tpu.dimension_semantics<parallel>], iteration_bounds = array<i64: 2, 1>, scalar_prefetch = 0 : i64, scratch_operands = 0 : i64, tpu.core_type = #tpu.core_type<tc>, window_params = [{pipeline_mode = #tpu.pipeline_mode<synchronous>, transform_indices = @transform_0, window_bounds = array<i64: 8, 4>}, {pipeline_mode = #tpu.pipeline_mode<synchronous>, transform_indices = @transform_1, window_bounds = array<i64: 8, 1>}, {transform_indices = @transform_2, window_bounds = array<i64: 1, 4, 256>}, {transform_indices = @transform_3, window_bounds = array<i64: 1, 8, 256>}]} {
    %c0 = arith.constant 0 : index
    %c0_0 = arith.constant 0 : index
    %0 = vector.load %arg2[%c0, %c0_0] : memref<8x4xf32, #tpu.memory_space<vmem>>, vector<8x4xf32>
    %c0_1 = arith.constant 0 : index
    %c0_2 = arith.constant 0 : index
    %c0_3 = arith.constant 0 : index
    %1 = vector.load %arg4[%c0_1, %c0_2, %c0_3] : memref<1x4x256xf32, #tpu.memory_space<vmem>>, vector<1x4x256xf32>
    %2 = vector.shape_cast %1 : vector<1x4x256xf32> to vector<4x256xf32>
    %cst = arith.constant dense<0.000000e+00> : vector<8x256xf32>
    %3 = tpu.matmul %0, %2, %cst {dimension_numbers = #tpu.dot_dimension_numbers<[1], [0], [0], [1], [0, 0, 1, 1], [], []>} : vector<8x4xf32>, vector<4x256xf32>, vector<8x256xf32> -> vector<8x256xf32>
    %c0_4 = arith.constant 0 : index
    %c0_5 = arith.constant 0 : index
    %4 = vector.load %arg3[%c0_4, %c0_5] : memref<8x1xf32, #tpu.memory_space<vmem>>, vector<8x1xf32>
    %5 = vector.broadcast %4 : vector<8x1xf32> to vector<8x256xf32>
    %6 = arith.addf %3, %5 : vector<8x256xf32>
    %7 = arith.negf %6 : vector<8x256xf32>
    %8 = math.exp %7 : vector<8x256xf32>
    %cst_6 = arith.constant 1.000000e+00 : f32
    %9 = vector.broadcast %cst_6 : f32 to vector<8x256xf32>
    %10 = arith.addf %9, %8 : vector<8x256xf32>
    %11 = arith.divf %9, %10 : vector<8x256xf32>
    %12 = arith.mulf %6, %11 : vector<8x256xf32>
    %c0_7 = arith.constant 0 : index
    %c0_8 = arith.constant 0 : index
    %c0_9 = arith.constant 0 : index
    %13 = vector.load %arg5[%c0_7, %c0_8, %c0_9] : memref<1x8x256xf32, #tpu.memory_space<vmem>>, vector<1x8x256xf32>
    %14 = vector.shape_cast %13 : vector<1x8x256xf32> to vector<8x256xf32>
    %15 = vector.shape_cast %12 : vector<8x256xf32> to vector<1x8x256xf32>
    tpu.vector_store %arg5[%c0_7, %c0_8, %c0_9], %15 {strides = array<i32>} : memref<1x8x256xf32, #tpu.memory_space<vmem>>, vector<1x8x256xf32>,
    return
  }
  func.func @transform_0(%arg0: i32, %arg1: i32) -> (i32, i32) {
    %c0_i32 = arith.constant 0 : i32
    %c0_i32_0 = arith.constant 0 : i32
    %c0_i32_1 = arith.constant 0 : i32
    return %c0_i32, %c0_i32_0 : i32, i32
  }
  func.func @transform_1(%arg0: i32, %arg1: i32) -> (i32, i32) {
    %c0_i32 = arith.constant 0 : i32
    %c0_i32_0 = arith.constant 0 : i32
    %c0_i32_1 = arith.constant 0 : i32
    return %c0_i32, %c0_i32_0 : i32, i32
  }
  func.func @transform_2(%arg0: i32, %arg1: i32) -> (i32, i32, i32) {
    %c0_i32 = arith.constant 0 : i32
    %c0_i32_0 = arith.constant 0 : i32
    return %arg0, %c0_i32, %arg1 : i32, i32, i32
  }
  func.func @transform_3(%arg0: i32, %arg1: i32) -> (i32, i32, i32) {
    %c0_i32 = arith.constant 0 : i32
    %c0_i32_0 = arith.constant 0 : i32
    return %arg0, %c0_i32, %arg1 : i32, i32, i32
  }
}

</mosaic_0001>

<llo_original>
// kernel: dw_contrans2d_forward.1
$region0: #{dw_contrans2d_forward.1}
  #allocation0 [shape = 'u32[]', space=smem, size = 0x4, offset = 0x4, fixed_abs, tag = 'smem constant byte address 0x4 - core index']
  #allocation1 [shape = 'u32[144,128]{1,0:T(1,128)}', space=vmem, size = 0x12000, scoped, tag = 'internal scratch']
  %s0 = inlined_call_operand.vmem [shape: f32[8,4], index: 0, kind: input, shape index: {}]
  %s1 = inlined_call_operand.vmem [shape: f32[8,1], index: 1, kind: input, shape index: {}]
  %s2 = inlined_call_operand.vmem [shape: f32[2,4,256], index: 2, kind: input, shape index: {}]
  %s3 = inlined_call_operand.vmem [shape: f32[2,8,256], index: 3, kind: output, shape index: {}]
  %s4 = sld [smem:[#allocation0]]
  $region45: #{dw_contrans2d_forward.1} parent=0
    _
  %s6 = ssub.s32 1, %s4
  %s7 = scalar_select 0, %s6, %s4
  loop: start=0, step=1, limit=4
  $region2: #{dw_contrans2d_forward.1} parent=0 // loop_pre_header
    _
  $region3: #{dw_contrans2d_forward.1} parent=0 // loop_header
    %s9 = sphi 0, %s13
    %p10 = scmp.ge.s32.totalorder %s9, 4
    %s16 = sphi 0, %s28
    %s17 = sphi 0, %s24
    %s18 = sphi 0, %s16
    %s19 = sphi 0, %s17
    %s20 = sphi 0, %s18
    %s21 = sphi 0, %s19
    %s29 = sphi 0, %s29
    %s31 = sphi 0, %s29
    %s32 = sphi 0, %s31
    %s46 = sphi 0, %s32
    %s50 = sphi 0, %s50
    %s52 = sphi 0, %s50
    %s53 = sphi 0, %s52
    %s67 = sphi 0, %s53
    %s75 = sphi 0, %s77
    %s78 = sphi 0, %s75
    %s79 = sphi 0, %s78
    %s95 = sphi 0, %s79
    %s103 = sphi 0, %s105
    %s106 = sphi 0, %s103
    %s107 = sphi 0, %s106
    %s123 = sphi 0, %s107
  $region4: #{dw_contrans2d_forward.1} parent=0 // loop_header_branch
    %12 = sbr.rel (%p10) target = $region8
  $region5: #{dw_contrans2d_forward.1} parent=0 // loop_body
    %s14 = ssub.s32 %s9, 1
    %s15 = ssub.s32 %s9, 2
    %s22 = sadd.s32 1, %s17
    %p23 = scmp.ge.s32.totalorder %s22, 1
    %s24 = scalar_select %p23, 0, %s22
    %s25 = sadd.s32 1, %s16
    %s26 = scalar_select %p23, %s25, %s16
    %p27 = scmp.ge.s32.totalorder %s26, 2
    %s28 = scalar_select %p27, 0, %s26
    %s30 = sadd.s32 %s29, 1
    %p33 = scmp.eq.s32.totalorder %s9, 1
    %p34 = scmp.ne.s32.totalorder %s29, %s31
    %p35 = scmp.eq.s32.totalorder %s9, 0
    %p36 = por %p34, %p35
    %p37 = scmp.ne.s32.totalorder %s29, %s31
    %p38 = scmp.eq.s32.totalorder %s14, 1
    %p39 = por %p37, %p38
    %p40 = scmp.ne.s32.totalorder %s31, %s32
    %p41 = scmp.eq.s32.totalorder %s14, 0
    %p42 = por %p40, %p41
    %p43 = scmp.ne.s32.totalorder %s31, %s32
    %p44 = scmp.eq.s32.totalorder %s15, 1
    %p45 = por %p43, %p44
    %p47 = scmp.ne.s32.totalorder %s32, %s46
    %p48 = scmp.eq.s32.totalorder %s15, 0
    %p49 = por %p47, %p48
    %s51 = sadd.s32 %s50, 1
    %p54 = scmp.eq.s32.totalorder %s9, 1
    %p55 = scmp.ne.s32.totalorder %s50, %s52
    %p56 = scmp.eq.s32.totalorder %s9, 0
    %p57 = por %p55, %p56
    %p58 = scmp.ne.s32.totalorder %s50, %s52
    %p59 = scmp.eq.s32.totalorder %s14, 1
    %p60 = por %p58, %p59
    %p61 = scmp.ne.s32.totalorder %s52, %s53
    %p62 = scmp.eq.s32.totalorder %s14, 0
    %p63 = por %p61, %p62
    %p64 = scmp.ne.s32.totalorder %s52, %s53
    %p65 = scmp.eq.s32.totalorder %s15, 1
    %p66 = por %p64, %p65
    %p68 = scmp.ne.s32.totalorder %s53, %s67
    %p69 = scmp.eq.s32.totalorder %s15, 0
    %p70 = por %p68, %p69
    %s71 = ssub.s32 %s16, %s28
    %s72 = ssub.s32 %s17, %s24
    %s73 = sor.u32 %s71, %s72
    %p74 = scmp.eq.s32.totalorder %s73, 0
    %s76 = sadd.s32 %s75, 1
    %s77 = scalar_select %p74, %s75, %s76
    %p80 = pneg %p74
    %p81 = scmp.eq.s32.totalorder %s9, 1
    %p82 = por %p80, %p81
    %p83 = scmp.ne.s32.totalorder %s75, %s78
    %p84 = scmp.eq.s32.totalorder %s9, 0
    %p85 = por %p83, %p84
    %p86 = scmp.ne.s32.totalorder %s75, %s78
    %p87 = scmp.eq.s32.totalorder %s14, 1
    %p88 = por %p86, %p87
    %p89 = scmp.ne.s32.totalorder %s78, %s79
    %p90 = scmp.eq.s32.totalorder %s14, 0
    %p91 = por %p89, %p90
    %p92 = scmp.ne.s32.totalorder %s78, %s79
    %p93 = scmp.eq.s32.totalorder %s15, 1
    %p94 = por %p92, %p93
    %p96 = scmp.ne.s32.totalorder %s79, %s95
    %p97 = scmp.eq.s32.totalorder %s15, 0
    %p98 = por %p96, %p97
    %s99 = ssub.s32 %s16, %s28
    %s100 = ssub.s32 %s17, %s24
    %s101 = sor.u32 %s99, %s100
    %p102 = scmp.eq.s32.totalorder %s101, 0
    %s104 = sadd.s32 %s103, 1
    %s105 = scalar_select %p102, %s103, %s104
    %p108 = pneg %p102
    %p109 = scmp.eq.s32.totalorder %s9, 1
    %p110 = por %p108, %p109
    %p111 = scmp.ne.s32.totalorder %s103, %s106
    %p112 = scmp.eq.s32.totalorder %s9, 0
    %p113 = por %p111, %p112
    %p114 = scmp.ne.s32.totalorder %s103, %s106
    %p115 = scmp.eq.s32.totalorder %s14, 1
    %p116 = por %p114, %p115
    %p117 = scmp.ne.s32.totalorder %s106, %s107
    %p118 = scmp.eq.s32.totalorder %s14, 0
    %p119 = por %p117, %p118
    %p120 = scmp.ne.s32.totalorder %s106, %s107
    %p121 = scmp.eq.s32.totalorder %s15, 1
    %p122 = por %p120, %p121
    %p124 = scmp.ne.s32.totalorder %s107, %s123
    %p125 = scmp.eq.s32.totalorder %s15, 0
    %p126 = por %p124, %p125
    %p127 = scmp.le.s32.totalorder 1, %s9
    %p128 = scmp.lt.s32.totalorder %s9, 3
    %p129 = pnand %p127, %p128
    %p130 = pneg %p129
    // Predicated region
    $region9: #{dw_contrans2d_forward.1} parent=5 // pred_check
      _
    $region10: #{dw_contrans2d_forward.1} parent=5 // pred_check_branch
      %132 = sbr.rel (%p129) target = $region12
    $region11: #{dw_contrans2d_forward.1} parent=5 // pred_region
      %s133 = ssub.s32 %s9, 1
      // Predicated region
      $region13: #{dw_contrans2d_forward.1} parent=11 // pred_check
        %p134 = pneg %p42
      $region14: #{dw_contrans2d_forward.1} parent=11 // pred_check_branch
        %136 = sbr.rel (%p134) target = $region16
      $region15: #{dw_contrans2d_forward.1} parent=11 // pred_region
        _
      $region16: #{dw_contrans2d_forward.1} parent=11 // pred_fallthru
        _
      // Predicated region
      $region17: #{dw_contrans2d_forward.1} parent=11 // pred_check
        %p137 = pneg %p63
      $region18: #{dw_contrans2d_forward.1} parent=11 // pred_check_branch
        %139 = sbr.rel (%p137) target = $region20
      $region19: #{dw_contrans2d_forward.1} parent=11 // pred_region
        _
      $region20: #{dw_contrans2d_forward.1} parent=11 // pred_fallthru
        _
    $region12: #{dw_contrans2d_forward.1} parent=5 // pred_fallthru
      _
    %p140 = scmp.lt.s32.totalorder %s9, 2
    // Predicated region
    $region21: #{dw_contrans2d_forward.1} parent=5 // pred_check
      %p141 = pneg %p140
    $region22: #{dw_contrans2d_forward.1} parent=5 // pred_check_branch
      %143 = sbr.rel (%p141) target = $region24
    $region23: #{dw_contrans2d_forward.1} parent=5 // pred_region
      // Predicated region
      $region25: #{dw_contrans2d_forward.1} parent=23 // pred_check
        %p144 = pneg %p85
      $region26: #{dw_contrans2d_forward.1} parent=23 // pred_check_branch
        %146 = sbr.rel (%p144) target = $region28
      $region27: #{dw_contrans2d_forward.1} parent=23 // pred_region
        %s147 = smul.u32 2, %s17
        %p148 = scmp.lt.s32.totalorder %s16, 1
        %s149 = scalar_select %p148, %s16, 1
        %p150 = scmp.lt.s32.totalorder %s147, 1
        %s151 = scalar_select %p150, %s147, 1
        %s152 = smul.addr %s149, 2
        %s153 = sadd.s32 %s151, %s152
        %s154 = smul.addr %s153, 4
        %s155 = scalar_lea.vmem %s2, %s154
        %s156 = smul.u32 2, %s17
      $region28: #{dw_contrans2d_forward.1} parent=23 // pred_fallthru
        _
    $region24: #{dw_contrans2d_forward.1} parent=5 // pred_fallthru
      _
    %p157 = scmp.le.s32.totalorder 1, %s9
    %p158 = scmp.lt.s32.totalorder %s9, 3
    %p159 = pnand %p157, %p158
    %p160 = pneg %p159
    // Predicated region
    $region29: #{dw_contrans2d_forward.1} parent=5 // pred_check
      _
    $region30: #{dw_contrans2d_forward.1} parent=5 // pred_check_branch
      %162 = sbr.rel (%p159) target = $region32
    $region31: #{dw_contrans2d_forward.1} parent=5 // pred_region
      %s163 = ssub.s32 %s9, 1
      %p164 = pneg %p42
      %p165 = pneg %p39
      %p166 = pneg %p63
      %p167 = pneg %p60
      %s168 = smul.u32 2, %s19
      %p169 = scmp.lt.s32.totalorder %s18, 1
      %s170 = scalar_select %p169, %s18, 1
      %p171 = scmp.lt.s32.totalorder %s168, 1
      %s172 = scalar_select %p171, %s168, 1
      %s173 = smul.addr %s170, 2
      %s174 = sadd.s32 %s172, %s173
      %s175 = smul.addr %s174, 4
      %s176 = scalar_lea.vmem %s2, %s175
      %p177 = pneg %p91
      %p178 = pneg %p88
      %p179 = pneg %p119
      %p180 = pneg %p116
      %s181 = smul.u32 2, %s19
      %p182 = scmp.lt.s32.totalorder %s18, 1
      %s183 = scalar_select %p182, %s18, 1
      %p184 = scmp.lt.s32.totalorder %s181, 1
      %s185 = scalar_select %p184, %s181, 1
      %s186 = smul.addr %s183, 2
      %s187 = sadd.s32 %s185, %s186
      %s188 = smul.addr %s187, 8
      %s189 = scalar_lea.vmem %s3, %s188
      %s190 = smul.u32 2, %s19
      %p191 = scmp.lt.s32.totalorder %s18, 1
      %s192 = scalar_select %p191, %s18, 1
      %p193 = scmp.lt.s32.totalorder %s190, 1
      %s194 = scalar_select %p193, %s190, 1
      %s195 = smul.addr %s192, 2
      %s196 = sadd.s32 %s194, %s195
      %s197 = smul.addr %s196, 4
      %s198 = scalar_lea.vmem %s2, %s197
      %s199 = smul.u32 2, %s19
      %s200 = smul.u32 2, %s19
      %p201 = scmp.lt.s32.totalorder %s18, 1
      %s202 = scalar_select %p201, %s18, 1
      %p203 = scmp.lt.s32.totalorder %s200, 1
      %s204 = scalar_select %p203, %s200, 1
      %s205 = smul.addr %s202, 2
      %s206 = sadd.s32 %s204, %s205
      %s207 = smul.addr %s206, 8
      %s208 = scalar_lea.vmem %s3, %s207
      %s209 = smul.u32 2, %s19
      %v210 = vld [vmem:[%s0] sm:$0xff]
      %v211 = vld [vmem:[%s198] sm:$0xff]
      %v212 = vld [vmem:[%s1] sm:$0xff]
      %214 = vset.pattern.permute.xlu0 0
      %215 = vperm.xlu0 %214, %v212
      %v216 = vpop.permute.xlu0 %215
      %v219 = vcombine.high %v211, %v211
      %vm220 = vcmask 31744
      %v222 = vsel %vm220, %v210, 0
      %vm224 = vcmask 1043456
      %v225 = vsel %vm224, %v211, 0
      %v227 = vsel %vm224, %v219, 0
      %229 = vmatprep.subr.mxu0 0.0
      %230 = vmatpush1.msra.mxu0 0.0
      %231 = vmatprep.subr.mxu0 0.0
      %232 = vmatpush1.msra.mxu0 0.0
      %233 = vmatprep.subr.mxu0 0.0
      %234 = vmatpush1.msra.mxu0 0.0
      %235 = vmatprep.subr.mxu0 0.0
      %236 = vmatpush1.msra.mxu0 0.0
      %237 = vmatprep.subr.mxu0 0.0
      %238 = vmatpush1.msra.mxu0 0.0
      %239 = vmatprep.subr.mxu0 0.0
      %240 = vmatpush1.msra.mxu0 0.0
      %241 = vmatprep.subr.mxu0 0.0
      %242 = vmatpush1.msra.mxu0 0.0
      %243 = vmatprep.subr.mxu0 0.0
      %244 = vmatpush1.msra.mxu0 0.0
      %245 = vmatprep.subr.mxu0 0.0
      %246 = vmatpush1.msra.mxu0 0.0
      %247 = vmatprep.subr.mxu0 0.0
      %248 = vmatpush1.msra.mxu0 0.0
      %249 = vmatprep.subr.mxu0 0.0
      %250 = vmatpush1.msra.mxu0 0.0
      %251 = vmatprep.subr.mxu0 0.0
      %252 = vmatpush1.msra.mxu0 0.0
      %253 = vmatprep.subr.mxu0 0.0
      %254 = vmatpush1.msra.mxu0 0.0
      %255 = vmatprep.subr.mxu0 0.0
      %256 = vmatpush1.msra.mxu0 0.0
      %257 = vmatprep.subr.mxu0 0.0
      %258 = vmatpush1.msra.mxu0 0.0
      %259 = vmatprep.subr.mxu0 %v227
      %260 = vmatpush1.msra.mxu0 %v225
      %261 = vmatprep.subr.mxu0 0.0
      %262 = vmatpush2.msra.mxu0 0.0
      %263 = vmatprep.subr.mxu0 0.0
      %264 = vmatpush2.msra.mxu0 0.0
      %265 = vmatprep.subr.mxu0 0.0
      %266 = vmatpush2.msra.mxu0 0.0
      %267 = vmatprep.subr.mxu0 0.0
      %268 = vmatpush2.msra.mxu0 0.0
      %269 = vmatprep.subr.mxu0 0.0
      %270 = vmatpush2.msra.mxu0 0.0
      %271 = vmatprep.subr.mxu0 0.0
      %272 = vmatpush2.msra.mxu0 0.0
      %273 = vmatprep.subr.mxu0 0.0
      %274 = vmatpush2.msra.mxu0 0.0
      %275 = vmatprep.subr.mxu0 0.0
      %276 = vmatpush2.msra.mxu0 0.0
      %277 = vmatprep.subr.mxu0 0.0
      %278 = vmatpush2.msra.mxu0 0.0
      %279 = vmatprep.subr.mxu0 0.0
      %280 = vmatpush2.msra.mxu0 0.0
      %281 = vmatprep.subr.mxu0 0.0
      %282 = vmatpush2.msra.mxu0 0.0
      %283 = vmatprep.subr.mxu0 0.0
      %284 = vmatpush2.msra.mxu0 0.0
      %285 = vmatprep.subr.mxu0 0.0
      %286 = vmatpush2.msra.mxu0 0.0
      %287 = vmatprep.subr.mxu0 0.0
      %288 = vmatpush2.msra.mxu0 0.0
      %289 = vmatprep.subr.mxu0 0.0
      %290 = vmatpush2.msra.mxu0 0.0
      %291 = vmatprep.subr.mxu0 0.0
      %292 = vmatpush2.msra.mxu0 0.0
      %293 = vmatprep.mubr.f32.mxu0 0.0
      %294 = vmatmul.mubr.f32.gmra.mxu0 %v222
      %v295 = vpop.f32.mrf.mxu0
      %v296 = vadd.f32 %v216, %v295
      %v297 = vpop.f32.mrf.mxu0
      %v298 = vadd.f32 %v216, %v297
      %299 = vdwg.mxu0
      %v300 = vxor.u32 %v296, 2147483648
      %v301 = vxor.u32 %v298, 2147483648
      %v302 = vmul.f32 %v300, 1.442695
      %v303 = vpow.pop %v302
      %v304 = vmul.f32 %v301, 1.442695
      %v305 = vpow.pop %v304
      %v306 = vadd.f32 %v303, 1.0
      %v307 = vadd.f32 %v305, 1.0
      %v308 = vrcp.pop %v306
      %v309 = vmul.f32 1.0, %v308
      %v310 = vrcp.pop %v307
      %v311 = vmul.f32 1.0, %v310
      %v312 = vmul.f32 %v296, %v309
      %v313 = vmul.f32 %v298, %v311
      %314 = vst [vmem:[%s208] sm:$0xff] %v312
      %315 = vst [vmem:[%s208 + $0x8] sm:$0xff] %v313
      %s316 = smul.u32 2, %s19
      %p317 = scmp.lt.s32.totalorder %s18, 1
      %s318 = scalar_select %p317, %s18, 1
      %p319 = scmp.lt.s32.totalorder %s316, 1
      %s320 = scalar_select %p319, %s316, 1
      %s321 = smul.addr %s318, 2
      %s322 = sadd.s32 %s320, %s321
      %s323 = smul.addr %s322, 8
      %s324 = scalar_lea.vmem %s3, %s323
      // Predicated region
      $region33: #{dw_contrans2d_forward.1} parent=31 // pred_check
        %p325 = pneg %p116
      $region34: #{dw_contrans2d_forward.1} parent=31 // pred_check_branch
        %327 = sbr.rel (%p325) target = $region36
      $region35: #{dw_contrans2d_forward.1} parent=31 // pred_region
        %s328 = smul.u32 2, %s19
      $region36: #{dw_contrans2d_forward.1} parent=31 // pred_fallthru
        _
    $region32: #{dw_contrans2d_forward.1} parent=5 // pred_fallthru
      _
    %p329 = scmp.le.s32.totalorder 2, %s9
    // Predicated region
    $region37: #{dw_contrans2d_forward.1} parent=5 // pred_check
      %p330 = pneg %p329
    $region38: #{dw_contrans2d_forward.1} parent=5 // pred_check_branch
      %332 = sbr.rel (%p330) target = $region40
    $region39: #{dw_contrans2d_forward.1} parent=5 // pred_region
      %s333 = ssub.s32 %s9, 2
      // Predicated region
      $region41: #{dw_contrans2d_forward.1} parent=39 // pred_check
        %p334 = pneg %p122
      $region42: #{dw_contrans2d_forward.1} parent=39 // pred_check_branch
        %336 = sbr.rel (%p334) target = $region44
      $region43: #{dw_contrans2d_forward.1} parent=39 // pred_region
        %s337 = smul.u32 2, %s21
        %p338 = scmp.lt.s32.totalorder %s20, 1
        %s339 = scalar_select %p338, %s20, 1
        %p340 = scmp.lt.s32.totalorder %s337, 1
        %s341 = scalar_select %p340, %s337, 1
        %s342 = smul.addr %s339, 2
        %s343 = sadd.s32 %s341, %s342
        %s344 = smul.addr %s343, 8
        %s345 = scalar_lea.vmem %s3, %s344
      $region44: #{dw_contrans2d_forward.1} parent=39 // pred_fallthru
        _
    $region40: #{dw_contrans2d_forward.1} parent=5 // pred_fallthru
      _
  $region6: #{dw_contrans2d_forward.1} parent=0 // loop_footer
    %s13 = sadd.s32 1, %s9
  $region7: #{dw_contrans2d_forward.1} parent=0 // loop_footer_branch
    %8 = sbr.rel target = $region3
  $region8: #{dw_contrans2d_forward.1} parent=0 // loop_exit
    _

</llo_original>
